<compile_context>
chip_gen: v5e
topology: v5e:2x2
jax: 0.10.0
libtpu: 0.0.40
codegen_flags: <defaults>
</compile_context>

<pallas_src>
import functools

import jax
import jax.numpy as jnp
from jax.experimental import pallas as pl
from jax.experimental.pallas import tpu as pltpu

# TODO(synk): dropout in the original layers.Linear is omitted (inference/eval semantics).


def _round_up(x, m):
    return ((x + m - 1) // m) * m


def _g2v_kernel(v_ref, w12_ref, b2_ref, cond_ref, w3h_ref, w3c_ref, b3_ref,
                out_ref, *, tn, vn, hp):
    """One batch tile of `tn` graphs, nodes flattened into the row axis.

    v_ref   : (tn*vn, Fp)   compute dtype (bf16 by default)
    w12_ref : (Fp, 2*Hp)    [W1 | W2] fused, compute dtype
    b2_ref  : (1, Hp)       f32
    cond_ref: (tn, Cp)      f32
    w3h_ref : (Hp, Op)      f32
    w3c_ref : (Cp, Op)      f32
    b3_ref  : (1, Op)       f32
    out_ref : (tn, Op)      f32
    """
    # Fused linear1/linear2 on the MXU: a single matmul with M = tn*vn rows.
    m = jnp.dot(v_ref[...], w12_ref[...],
                preferred_element_type=jnp.float32)            # (tn*vn, 2*Hp) f32
    v1 = m[:, :hp]                                             # linear1 (no bias)
    v2 = jax.nn.sigmoid(m[:, hp:] + b2_ref[...])               # linear2 + sigmoid (f32)

    # Gated sum over the node axis. H stays on lanes; the per-graph node sum is a
    # cheap sublane reduction (XLU) that overlaps with MXU work.
    z = jnp.sum((v1 * v2).reshape(tn, vn, hp), axis=1)         # (tn, Hp) f32

    # linear3 on [Z, cond]  ==  Z @ W3h + cond @ W3c + b3   (algebraically exact split)
    out = (jnp.dot(z, w3h_ref[...], preferred_element_type=jnp.float32)
           + jnp.dot(cond_ref[...], w3c_ref[...], preferred_element_type=jnp.float32)
           + b3_ref[...])                                      # (tn, Op)
    out_ref[...] = out.astype(out_ref.dtype)


def graph2vec_forward(v, cond, params, *, compute_dtype=jnp.bfloat16,
                      max_graphs_per_step=64):
    """v: (N, V, F) f32, cond: (N, C) f32 or None, params: dict of weights.

    Weights stored (in_features, out_features): w1,w2:(F,H), b2:(1,H),
    w3h:(H,O), w3c:(C,O), b3:(1,O).
    """
    N, V, F = v.shape
    C = 0 if cond is None else cond.shape[-1]
    w1, w2, b2, w3h, w3c, b3 = (params["w1"], params["w2"], params["b2"],
                                params["w3h"], params["w3c"], params["b3"])
    H = w1.shape[1]
    O = w3h.shape[1]

    # Lane-dense padded feature dims (multiples of 128).
    Fp = _round_up(F, 128)
    Hp = _round_up(H, 128)
    Cp = _round_up(max(C, 1), 128)
    Op = _round_up(O, 128)

    # Batch tile: as many graphs per grid step as a modest VMEM budget allows for the
    # (double-buffered) v slab, capped at `max_graphs_per_step`, multiple of 8.
    itemsize = jnp.dtype(compute_dtype).itemsize
    v_tile_budget = 8 * 1024 * 1024                          # bytes per v buffer
    rows = max(8, v_tile_budget // max(1, 2 * V * Fp * itemsize))
    TN = max(8, min(max_graphs_per_step, (rows // 8) * 8))
    TN = min(TN, _round_up(N, 8))
    Np = _round_up(N, TN)
    grid = (Np // TN,)

    f32 = jnp.float32
    # Zero padding keeps the math exact: padded features / rows contribute 0.
    v2d = (jnp.pad(v, ((0, Np - N), (0, 0), (0, Fp - F)))
           .reshape(Np * V, Fp).astype(compute_dtype))
    w12 = jnp.concatenate(
        [jnp.pad(w1, ((0, Fp - F), (0, Hp - H))),
         jnp.pad(w2, ((0, Fp - F), (0, Hp - H)))], axis=1).astype(compute_dtype)
    b2_p = jnp.pad(b2, ((0, 0), (0, Hp - H))).astype(f32)
    w3h_p = jnp.pad(w3h, ((0, Hp - H), (0, Op - O))).astype(f32)
    b3_p = jnp.pad(b3, ((0, 0), (0, Op - O))).astype(f32)
    if C > 0:
        cond_p = jnp.pad(cond, ((0, Np - N), (0, Cp - C))).astype(f32)
        w3c_p = jnp.pad(w3c, ((0, Cp - C), (0, Op - O))).astype(f32)
    else:  # cond_size == 0: zero columns contribute nothing (exact)
        cond_p = jnp.zeros((Np, Cp), f32)
        w3c_p = jnp.zeros((Cp, Op), f32)

    flops = 2 * Np * V * Fp * (2 * Hp) + 2 * Np * (Hp + Cp) * Op
    transcendentals = Np * V * Hp                            # sigmoid
    bytes_accessed = (v2d.size * itemsize + w12.size * itemsize
                      + (b2_p.size + cond_p.size + w3h_p.size + w3c_p.size
                         + b3_p.size + Np * Op) * 4)

    out_p = pl.pallas_call(
        functools.partial(_g2v_kernel, tn=TN, vn=V, hp=Hp),
        out_shape=jax.ShapeDtypeStruct((Np, Op), jnp.float32),
        grid_spec=pltpu.PrefetchScalarGridSpec(
            num_scalar_prefetch=0,
            grid=grid,
            in_specs=[
                pl.BlockSpec((TN * V, Fp), lambda n: (n, 0)),   # v slab (graphs*nodes)
                pl.BlockSpec((Fp, 2 * Hp), lambda n: (0, 0)),   # [W1 | W2]
                pl.BlockSpec((1, Hp), lambda n: (0, 0)),        # b2
                pl.BlockSpec((TN, Cp), lambda n: (n, 0)),       # cond tile
                pl.BlockSpec((Hp, Op), lambda n: (0, 0)),       # W3 (hidden part)
                pl.BlockSpec((Cp, Op), lambda n: (0, 0)),       # W3 (cond part)
                pl.BlockSpec((1, Op), lambda n: (0, 0)),        # b3
            ],
            out_specs=pl.BlockSpec((TN, Op), lambda n: (n, 0)),
        ),
        compiler_params=pltpu.CompilerParams(
            dimension_semantics=("parallel",),      # batch tiles shard across TCs (v7x)
            vmem_limit_bytes=48 * 1024 * 1024),     # above 16/32 MiB defaults, < v7x 64 MiB
        cost_estimate=pl.CostEstimate(flops=flops,
                                      transcendentals=transcendentals,
                                      bytes_accessed=bytes_accessed),
    )(v2d, w12, b2_p, cond_p, w3h_p, w3c_p, b3_p)

    return out_p[:N, :O]


def _reference(v, cond, p):
    v1 = jnp.einsum("nvf,fh->nvh", v, p["w1"])
    v2 = jax.nn.sigmoid(jnp.einsum("nvf,fh->nvh", v, p["w2"]) + p["b2"][0])
    z = jnp.sum(v1 * v2, axis=1)
    z = jnp.concatenate([z, cond], axis=-1)
    w3 = jnp.concatenate([p["w3h"], p["w3c"]], axis=0)
    return z @ w3 + p["b3"][0]


if __name__ == "__main__":
    # Small shapes consistent with the module's forward: v (N, V, F), cond (N, C)
    N, V, F, H, C, O = 2, 8, 32, 32, 8, 16

    key = jax.random.PRNGKey(0)
    k_v, k_c, k1, k2, kb2, k3, kb3 = jax.random.split(key, 7)

    v = jax.random.normal(k_v, (N, V, F), dtype=jnp.float32)
    cond = jax.random.normal(k_c, (N, C), dtype=jnp.float32)

    # Deterministic synthetic parameters (shapes from Graph2Vec.__init__)
    w3_full = jax.random.normal(k3, (H + C, O), dtype=jnp.float32) * 0.1
    params = {
        "w1": jax.random.normal(k1, (F, H), dtype=jnp.float32) * 0.1,   # linear1, no bias
        "w2": jax.random.normal(k2, (F, H), dtype=jnp.float32) * 0.1,   # linear2
        "b2": jax.random.normal(kb2, (1, H), dtype=jnp.float32) * 0.1,
        "w3h": w3_full[:H],                                             # linear3 (hidden)
        "w3c": w3_full[H:],                                             # linear3 (cond)
        "b3": jax.random.normal(kb3, (1, O), dtype=jnp.float32) * 0.1,
    }

    ref = _reference(v, cond, params)

    # 1) f32 compute path: exact check against the reference.
    out_f32 = jax.block_until_ready(
        graph2vec_forward(v, cond, params, compute_dtype=jnp.float32))
    assert out_f32.shape == (N, O)
    assert jnp.allclose(out_f32, ref, atol=1e-5, rtol=1e-5), "f32 mismatch vs reference"

    # 2) default bf16 compute path (fast path): loose tolerance for bf16 input rounding.
    out_bf16 = jax.block_until_ready(graph2vec_forward(v, cond, params))
    assert out_bf16.shape == (N, O)
    assert jnp.allclose(out_bf16, ref, atol=1e-1, rtol=1e-1), "bf16 mismatch vs reference"

    print("KERNEL_OK")
</pallas_src>

<mosaic_0001>
module attributes {stable_mosaic.version = 11 : i64} {
  func.func @_g2v_kernel(%arg0: i32, %arg1: memref<64x128xf32, #tpu.memory_space<vmem>>, %arg2: memref<128x256xf32, #tpu.memory_space<vmem>>, %arg3: memref<1x128xf32, #tpu.memory_space<vmem>>, %arg4: memref<8x128xf32, #tpu.memory_space<vmem>>, %arg5: memref<128x128xf32, #tpu.memory_space<vmem>>, %arg6: memref<128x128xf32, #tpu.memory_space<vmem>>, %arg7: memref<1x128xf32, #tpu.memory_space<vmem>>, %arg8: memref<8x128xf32, #tpu.memory_space<vmem>>) attributes {dimension_semantics = [#tpu.dimension_semantics<parallel>], iteration_bounds = array<i64: 1>, scalar_prefetch = 0 : i64, scratch_operands = 0 : i64, tpu.core_type = #tpu.core_type<tc>, window_params = [{transform_indices = @transform_0, window_bounds = array<i64: 64, 128>}, {pipeline_mode = #tpu.pipeline_mode<synchronous>, transform_indices = @transform_1, window_bounds = array<i64: 128, 256>}, {pipeline_mode = #tpu.pipeline_mode<synchronous>, transform_indices = @transform_2, window_bounds = array<i64: 1, 128>}, {transform_indices = @transform_3, window_bounds = array<i64: 8, 128>}, {pipeline_mode = #tpu.pipeline_mode<synchronous>, transform_indices = @transform_4, window_bounds = array<i64: 128, 128>}, {pipeline_mode = #tpu.pipeline_mode<synchronous>, transform_indices = @transform_5, window_bounds = array<i64: 128, 128>}, {pipeline_mode = #tpu.pipeline_mode<synchronous>, transform_indices = @transform_6, window_bounds = array<i64: 1, 128>}, {transform_indices = @transform_7, window_bounds = array<i64: 8, 128>}]} {
    %c0 = arith.constant 0 : index
    %c0_0 = arith.constant 0 : index
    %0 = vector.load %arg1[%c0, %c0_0] : memref<64x128xf32, #tpu.memory_space<vmem>>, vector<64x128xf32>
    %c0_1 = arith.constant 0 : index
    %c0_2 = arith.constant 0 : index
    %1 = vector.load %arg2[%c0_1, %c0_2] : memref<128x256xf32, #tpu.memory_space<vmem>>, vector<128x256xf32>
    %cst = arith.constant dense<0.000000e+00> : vector<64x256xf32>
    %2 = tpu.matmul %0, %1, %cst {dimension_numbers = #tpu.dot_dimension_numbers<[1], [0], [0], [1], [0, 0, 1, 1], [], []>} : vector<64x128xf32>, vector<128x256xf32>, vector<64x256xf32> -> vector<64x256xf32>
    %3 = vector.extract_strided_slice %2 {offsets = [0, 0], sizes = [64, 128], strides = [1, 1]} : vector<64x256xf32> to vector<64x128xf32>
    %4 = vector.extract_strided_slice %2 {offsets = [0, 128], sizes = [64, 128], strides = [1, 1]} : vector<64x256xf32> to vector<64x128xf32>
    %c0_3 = arith.constant 0 : index
    %c0_4 = arith.constant 0 : index
    %5 = vector.load %arg3[%c0_3, %c0_4] : memref<1x128xf32, #tpu.memory_space<vmem>>, vector<1x128xf32>
    %6 = vector.broadcast %5 : vector<1x128xf32> to vector<64x128xf32>
    %7 = arith.addf %4, %6 : vector<64x128xf32>
    %8 = arith.negf %7 : vector<64x128xf32>
    %9 = math.exp %8 : vector<64x128xf32>
    %cst_5 = arith.constant 1.000000e+00 : f32
    %10 = vector.broadcast %cst_5 : f32 to vector<64x128xf32>
    %11 = arith.addf %10, %9 : vector<64x128xf32>
    %12 = arith.divf %10, %11 : vector<64x128xf32>
    %13 = arith.mulf %3, %12 : vector<64x128xf32>
    %14 = vector.shape_cast %13 : vector<64x128xf32> to vector<8x8x128xf32>
    %cst_6 = arith.constant dense<0.000000e+00> : vector<8x128xf32>
    %15 = vector.multi_reduction <add>, %14, %cst_6 [1] : vector<8x8x128xf32> to vector<8x128xf32>
    %c0_7 = arith.constant 0 : index
    %c0_8 = arith.constant 0 : index
    %16 = vector.load %arg5[%c0_7, %c0_8] : memref<128x128xf32, #tpu.memory_space<vmem>>, vector<128x128xf32>
    %cst_9 = arith.constant dense<0.000000e+00> : vector<8x128xf32>
    %17 = tpu.matmul %15, %16, %cst_9 {dimension_numbers = #tpu.dot_dimension_numbers<[1], [0], [0], [1], [0, 0, 1, 1], [], []>} : vector<8x128xf32>, vector<128x128xf32>, vector<8x128xf32> -> vector<8x128xf32>
    %c0_10 = arith.constant 0 : index
    %c0_11 = arith.constant 0 : index
    %18 = vector.load %arg4[%c0_10, %c0_11] : memref<8x128xf32, #tpu.memory_space<vmem>>, vector<8x128xf32>
    %c0_12 = arith.constant 0 : index
    %c0_13 = arith.constant 0 : index
    %19 = vector.load %arg6[%c0_12, %c0_13] : memref<128x128xf32, #tpu.memory_space<vmem>>, vector<128x128xf32>
    %cst_14 = arith.constant dense<0.000000e+00> : vector<8x128xf32>
    %20 = tpu.matmul %18, %19, %cst_14 {dimension_numbers = #tpu.dot_dimension_numbers<[1], [0], [0], [1], [0, 0, 1, 1], [], []>} : vector<8x128xf32>, vector<128x128xf32>, vector<8x128xf32> -> vector<8x128xf32>
    %21 = arith.addf %17, %20 : vector<8x128xf32>
    %c0_15 = arith.constant 0 : index
    %c0_16 = arith.constant 0 : index
    %22 = vector.load %arg7[%c0_15, %c0_16] : memref<1x128xf32, #tpu.memory_space<vmem>>, vector<1x128xf32>
    %23 = vector.broadcast %22 : vector<1x128xf32> to vector<8x128xf32>
    %24 = arith.addf %21, %23 : vector<8x128xf32>
    %c0_17 = arith.constant 0 : index
    %c0_18 = arith.constant 0 : index
    %25 = vector.load %arg8[%c0_17, %c0_18] : memref<8x128xf32, #tpu.memory_space<vmem>>, vector<8x128xf32>
    tpu.vector_store %arg8[%c0_17, %c0_18], %24 {strides = array<i32>} : memref<8x128xf32, #tpu.memory_space<vmem>>, vector<8x128xf32>,
    return
  }
  func.func @transform_0(%arg0: i32) -> (i32, i32) {
    %c0_i32 = arith.constant 0 : i32
    %c0_i32_0 = arith.constant 0 : i32
    return %arg0, %c0_i32 : i32, i32
  }
  func.func @transform_1(%arg0: i32) -> (i32, i32) {
    %c0_i32 = arith.constant 0 : i32
    %c0_i32_0 = arith.constant 0 : i32
    %c0_i32_1 = arith.constant 0 : i32
    return %c0_i32, %c0_i32_0 : i32, i32
  }
  func.func @transform_2(%arg0: i32) -> (i32, i32) {
    %c0_i32 = arith.constant 0 : i32
    %c0_i32_0 = arith.constant 0 : i32
    %c0_i32_1 = arith.constant 0 : i32
    return %c0_i32, %c0_i32_0 : i32, i32
  }
  func.func @transform_3(%arg0: i32) -> (i32, i32) {
    %c0_i32 = arith.constant 0 : i32
    %c0_i32_0 = arith.constant 0 : i32
    return %arg0, %c0_i32 : i32, i32
  }
  func.func @transform_4(%arg0: i32) -> (i32, i32) {
    %c0_i32 = arith.constant 0 : i32
    %c0_i32_0 = arith.constant 0 : i32
    %c0_i32_1 = arith.constant 0 : i32
    return %c0_i32, %c0_i32_0 : i32, i32
  }
  func.func @transform_5(%arg0: i32) -> (i32, i32) {
    %c0_i32 = arith.constant 0 : i32
    %c0_i32_0 = arith.constant 0 : i32
    %c0_i32_1 = arith.constant 0 : i32
    return %c0_i32, %c0_i32_0 : i32, i32
  }
  func.func @transform_6(%arg0: i32) -> (i32, i32) {
    %c0_i32 = arith.constant 0 : i32
    %c0_i32_0 = arith.constant 0 : i32
    %c0_i32_1 = arith.constant 0 : i32
    return %c0_i32, %c0_i32_0 : i32, i32
  }
  func.func @transform_7(%arg0: i32) -> (i32, i32) {
    %c0_i32 = arith.constant 0 : i32
    %c0_i32_0 = arith.constant 0 : i32
    return %arg0, %c0_i32 : i32, i32
  }
}

</mosaic_0001>

<llo_original>
// kernel: tpu_custom_call.1
$region0: #{tpu_custom_call.1}
  #allocation0 [shape = 'u32[]', space=smem, size = 0x4, offset = 0x4, fixed_abs, tag = 'smem constant byte address 0x4 - core index']
  #allocation1 [shape = 'u32[72,128]{1,0:T(1,128)}', space=vmem, size = 0x9000, scoped, tag = 'internal scratch']
  %s0 = inlined_call_operand.hbm [shape: f32[64,128], index: 0, kind: input, shape index: {}]
  %s1 = inlined_call_operand.hbm [shape: f32[128,256], index: 1, kind: input, shape index: {}]
  %s2 = inlined_call_operand.vmem [shape: f32[1,128], index: 2, kind: input, shape index: {}]
  %s3 = inlined_call_operand.hbm [shape: f32[8,128], index: 3, kind: input, shape index: {}]
  %s4 = inlined_call_operand.hbm [shape: f32[128,128], index: 4, kind: input, shape index: {}]
  %s5 = inlined_call_operand.hbm [shape: f32[128,128], index: 5, kind: input, shape index: {}]
  %s6 = inlined_call_operand.vmem [shape: f32[1,128], index: 6, kind: input, shape index: {}]
  %s7 = inlined_call_operand.hbm [shape: f32[8,128], index: 7, kind: output, shape index: {}]
  %s8 = sld [smem:[#allocation0]]
  $region58: #{tpu_custom_call.1} parent=0
    _
  %s10 = ssub.s32 1, %s8
  %s11 = scalar_select 0, %s10, %s8
  $region1: #{tpu_custom_call.1} parent=0
    #allocation2 [shape = 'u8[32768]{0}', space=vmem, size = 0x8000, scoped, tag = 'input window, operand 0, single buffered']
    #allocation3 [shape = 's32[1]{0}', space=sflag, size = 0x4, scoped, tag = 'scoped memory for tpu_custom_call.1']
    #allocation4 [shape = 's32[1]{0}', space=sflag, size = 0x4, scoped, tag = 'scoped memory for tpu_custom_call.1']
    #allocation5 [shape = 'u8[131072]{0}', space=vmem, size = 0x20000, scoped, tag = 'input window, operand 1, single buffered']
    #allocation6 [shape = 's32[1]{0}', space=sflag, size = 0x4, scoped, tag = 'scoped memory for tpu_custom_call.1']
    #allocation7 [shape = 'u8[4096]{0}', space=vmem, size = 0x1000, scoped, tag = 'input window, operand 3, single buffered']
    #allocation8 [shape = 'u8[65536]{0}', space=vmem, size = 0x10000, scoped, tag = 'input window, operand 4, single buffered']
    #allocation9 [shape = 's32[1]{0}', space=sflag, size = 0x4, scoped, tag = 'scoped memory for tpu_custom_call.1']
    #allocation10 [shape = 'u8[65536]{0}', space=vmem, size = 0x10000, scoped, tag = 'input window, operand 5, single buffered']
    #allocation11 [shape = 'u8[4096]{0}', space=vmem, size = 0x1000, scoped, tag = 'output window, operand 0, single buffered']
    %12 = vsyncpa [#allocation3], 0
    %13 = vsyncpa [#allocation6], 0
    %14 = vsyncpa [#allocation9], 0
    %15 = vsyncpa [#allocation4], 0
    // Predicated region
    $region2: #{tpu_custom_call.1} parent=1 // pred_check
      _
    $region3: #{tpu_custom_call.1} parent=1 // pred_check_branch
      %17 = sbr.rel (0) target = $region5
    $region4: #{tpu_custom_call.1} parent=1 // pred_region
      %19 = vsyncadd [#allocation3], 0
      %s20 = sshll.u32 %s0, 4
      %s21 = int_to_ptr.hbm [resolvable:$true] %s20
      %s22 = sshll.u32 [#allocation2], 4
      %s23 = int_to_ptr.vmem [resolvable:$true] %s22
      %28 = dma.hbm_to_vmem [thread:$0]  %s21, 1024, %s23, [#allocation3], 128, 128, 8
    $region5: #{tpu_custom_call.1} parent=1 // pred_fallthru
      _
    // Predicated region
    $region6: #{tpu_custom_call.1} parent=1 // pred_check
      _
    $region7: #{tpu_custom_call.1} parent=1 // pred_check_branch
      %30 = sbr.rel (0) target = $region9
    $region8: #{tpu_custom_call.1} parent=1 // pred_region
      %32 = vsyncadd [#allocation6], 0
      %s33 = sshll.u32 %s1, 4
      %s34 = int_to_ptr.hbm [resolvable:$true] %s33
      %s35 = sshll.u32 [#allocation5], 4
      %s36 = int_to_ptr.vmem [resolvable:$true] %s35
      %41 = dma.hbm_to_vmem [thread:$0]  %s34, 4096, %s36, [#allocation6], 256, 256, 16
    $region9: #{tpu_custom_call.1} parent=1 // pred_fallthru
      _
    // Predicated region
    $region10: #{tpu_custom_call.1} parent=1 // pred_check
      _
    $region11: #{tpu_custom_call.1} parent=1 // pred_check_branch
      %43 = sbr.rel (0) target = $region13
    $region12: #{tpu_custom_call.1} parent=1 // pred_region
      _
    $region13: #{tpu_custom_call.1} parent=1 // pred_fallthru
      _
    // Predicated region
    $region14: #{tpu_custom_call.1} parent=1 // pred_check
      _
    $region15: #{tpu_custom_call.1} parent=1 // pred_check_branch
      %45 = sbr.rel (0) target = $region17
    $region16: #{tpu_custom_call.1} parent=1 // pred_region
      %47 = vsyncadd [#allocation6], 0
      %s49 = sshll.u32 %s3, 4
      %s50 = int_to_ptr.hbm [resolvable:$true] %s49
      %s51 = sshll.u32 [#allocation7], 4
      %s52 = int_to_ptr.vmem [resolvable:$true] %s51
      %54 = dma.hbm_to_vmem [thread:$0]  %s50, 128, %s52, [#allocation6]
    $region17: #{tpu_custom_call.1} parent=1 // pred_fallthru
      _
    // Predicated region
    $region18: #{tpu_custom_call.1} parent=1 // pred_check
      _
    $region19: #{tpu_custom_call.1} parent=1 // pred_check_branch
      %56 = sbr.rel (0) target = $region21
    $region20: #{tpu_custom_call.1} parent=1 // pred_region
      %58 = vsyncadd [#allocation9], 0
      %s59 = sshll.u32 %s4, 4
      %s60 = int_to_ptr.hbm [resolvable:$true] %s59
      %s61 = sshll.u32 [#allocation8], 4
      %s62 = int_to_ptr.vmem [resolvable:$true] %s61
      %67 = dma.hbm_to_vmem [thread:$0]  %s60, 2048, %s62, [#allocation9], 128, 128, 8
    $region21: #{tpu_custom_call.1} parent=1 // pred_fallthru
      _
    // Predicated region
    $region22: #{tpu_custom_call.1} parent=1 // pred_check
      _
    $region23: #{tpu_custom_call.1} parent=1 // pred_check_branch
      %69 = sbr.rel (0) target = $region25
    $region24: #{tpu_custom_call.1} parent=1 // pred_region
      %71 = vsyncadd [#allocation9], 0
      %s72 = sshll.u32 %s5, 4
      %s73 = int_to_ptr.hbm [resolvable:$true] %s72
      %s74 = sshll.u32 [#allocation10], 4
      %s75 = int_to_ptr.vmem [resolvable:$true] %s74
      %80 = dma.hbm_to_vmem [thread:$0]  %s73, 2048, %s75, [#allocation9], 128, 128, 8
    $region25: #{tpu_custom_call.1} parent=1 // pred_fallthru
      _
    // Predicated region
    $region26: #{tpu_custom_call.1} parent=1 // pred_check
      _
    $region27: #{tpu_custom_call.1} parent=1 // pred_check_branch
      %82 = sbr.rel (0) target = $region29
    $region28: #{tpu_custom_call.1} parent=1 // pred_region
      _
    $region29: #{tpu_custom_call.1} parent=1 // pred_fallthru
      _
    // Predicated region
    $region30: #{tpu_custom_call.1} parent=1 // pred_check
      _
    $region31: #{tpu_custom_call.1} parent=1 // pred_check_branch
      %84 = sbr.rel (0) target = $region33
    $region32: #{tpu_custom_call.1} parent=1 // pred_region
      %86 = dma.done [#allocation3], 1024
    $region33: #{tpu_custom_call.1} parent=1 // pred_fallthru
      _
    // Predicated region
    $region34: #{tpu_custom_call.1} parent=1 // pred_check
      _
    $region35: #{tpu_custom_call.1} parent=1 // pred_check_branch
      %88 = sbr.rel (0) target = $region37
    $region36: #{tpu_custom_call.1} parent=1 // pred_region
      %90 = dma.done [#allocation6], 4096
    $region37: #{tpu_custom_call.1} parent=1 // pred_fallthru
      _
    // Predicated region
    $region38: #{tpu_custom_call.1} parent=1 // pred_check
      _
    $region39: #{tpu_custom_call.1} parent=1 // pred_check_branch
      %92 = sbr.rel (0) target = $region41
    $region40: #{tpu_custom_call.1} parent=1 // pred_region
      %94 = dma.done [#allocation6], 128
    $region41: #{tpu_custom_call.1} parent=1 // pred_fallthru
      _
    // Predicated region
    $region42: #{tpu_custom_call.1} parent=1 // pred_check
      _
    $region43: #{tpu_custom_call.1} parent=1 // pred_check_branch
      %96 = sbr.rel (0) target = $region45
    $region44: #{tpu_custom_call.1} parent=1 // pred_region
      %98 = dma.done [#allocation9], 2048
    $region45: #{tpu_custom_call.1} parent=1 // pred_fallthru
      _
    // Predicated region
    $region46: #{tpu_custom_call.1} parent=1 // pred_check
      _
    $region47: #{tpu_custom_call.1} parent=1 // pred_check_branch
      %100 = sbr.rel (0) target = $region49
    $region48: #{tpu_custom_call.1} parent=1 // pred_region
      %102 = dma.done [#allocation9], 2048
    $region49: #{tpu_custom_call.1} parent=1 // pred_fallthru
      _
    %v103 = vld [vmem:[#allocation2] sm:$0xff]
    %v104 = vld [vmem:[#allocation2 + $0x8] sm:$0xff]
    %v105 = vld [vmem:[#allocation2 + $0x10] sm:$0xff]
    %v106 = vld [vmem:[#allocation2 + $0x18] sm:$0xff]
    %v107 = vld [vmem:[#allocation2 + $0x20] sm:$0xff]
    %v108 = vld [vmem:[#allocation2 + $0x28] sm:$0xff]
    %v109 = vld [vmem:[#allocation2 + $0x30] sm:$0xff]
    %v110 = vld [vmem:[#allocation2 + $0x38] sm:$0xff]
    %v111 = vld [vmem:[#allocation5] sm:$0xff]
    %v112 = vld [vmem:[#allocation5 + $0x8] sm:$0xff]
    %v113 = vld [vmem:[#allocation5 + $0x10] sm:$0xff]
    %v114 = vld [vmem:[#allocation5 + $0x18] sm:$0xff]
    %v115 = vld [vmem:[#allocation5 + $0x20] sm:$0xff]
    %v116 = vld [vmem:[#allocation5 + $0x28] sm:$0xff]
    %v117 = vld [vmem:[#allocation5 + $0x30] sm:$0xff]
    %v118 = vld [vmem:[#allocation5 + $0x38] sm:$0xff]
    %v119 = vld [vmem:[#allocation5 + $0x40] sm:$0xff]
    %v120 = vld [vmem:[#allocation5 + $0x48] sm:$0xff]
    %v121 = vld [vmem:[#allocation5 + $0x50] sm:$0xff]
    %v122 = vld [vmem:[#allocation5 + $0x58] sm:$0xff]
    %v123 = vld [vmem:[#allocation5 + $0x60] sm:$0xff]
    %v124 = vld [vmem:[#allocation5 + $0x68] sm:$0xff]
    %v125 = vld [vmem:[#allocation5 + $0x70] sm:$0xff]
    %v126 = vld [vmem:[#allocation5 + $0x78] sm:$0xff]
    %v127 = vld [vmem:[#allocation5 + $0x80] sm:$0xff]
    %v128 = vld [vmem:[#allocation5 + $0x88] sm:$0xff]
    %v129 = vld [vmem:[#allocation5 + $0x90] sm:$0xff]
    %v130 = vld [vmem:[#allocation5 + $0x98] sm:$0xff]
    %v131 = vld [vmem:[#allocation5 + $0xa0] sm:$0xff]
    %v132 = vld [vmem:[#allocation5 + $0xa8] sm:$0xff]
    %v133 = vld [vmem:[#allocation5 + $0xb0] sm:$0xff]
    %v134 = vld [vmem:[#allocation5 + $0xb8] sm:$0xff]
    %v135 = vld [vmem:[#allocation5 + $0xc0] sm:$0xff]
    %v136 = vld [vmem:[#allocation5 + $0xc8] sm:$0xff]
    %v137 = vld [vmem:[#allocation5 + $0xd0] sm:$0xff]
    %v138 = vld [vmem:[#allocation5 + $0xd8] sm:$0xff]
    %v139 = vld [vmem:[#allocation5 + $0xe0] sm:$0xff]
    %v140 = vld [vmem:[#allocation5 + $0xe8] sm:$0xff]
    %v141 = vld [vmem:[#allocation5 + $0xf0] sm:$0xff]
    %v142 = vld [vmem:[#allocation5 + $0xf8] sm:$0xff]
    %143 = vmatpush.msra.mxu0 %v141
    %144 = vmatpush.msra.mxu0 %v139
    %145 = vmatpush.msra.mxu0 %v137
    %146 = vmatpush.msra.mxu0 %v135
    %147 = vmatpush.msra.mxu0 %v133
    %148 = vmatpush.msra.mxu0 %v131
    %149 = vmatpush.msra.mxu0 %v129
    %150 = vmatpush.msra.mxu0 %v127
    %151 = vmatpush.msra.mxu0 %v125
    %152 = vmatpush.msra.mxu0 %v123
    %153 = vmatpush.msra.mxu0 %v121
    %154 = vmatpush.msra.mxu0 %v119
    %155 = vmatpush.msra.mxu0 %v117
    %156 = vmatpush.msra.mxu0 %v115
    %157 = vmatpush.msra.mxu0 %v113
    %158 = vmatpush.msra.mxu0 %v111
    %159 = vmatmul.f32.gmra.mxu0 %v103
    %v160 = vpop.f32.mrf.mxu0
    %v161 = vadd.f32 0.0, %v160
    %162 = vmatmul.f32.gmra.mxu0 %v104
    %v163 = vpop.f32.mrf.mxu0
    %v164 = vadd.f32 0.0, %v163
    %165 = vmatmul.f32.gmra.mxu0 %v105
    %v166 = vpop.f32.mrf.mxu0
    %v167 = vadd.f32 0.0, %v166
    %168 = vmatmul.f32.gmra.mxu0 %v106
    %v169 = vpop.f32.mrf.mxu0
    %v170 = vadd.f32 0.0, %v169
    %171 = vmatmul.f32.gmra.mxu0 %v107
    %v172 = vpop.f32.mrf.mxu0
    %v173 = vadd.f32 0.0, %v172
    %174 = vmatmul.f32.gmra.mxu0 %v108
    %v175 = vpop.f32.mrf.mxu0
    %v176 = vadd.f32 0.0, %v175
    %177 = vmatmul.f32.gmra.mxu0 %v109
    %v178 = vpop.f32.mrf.mxu0
    %v179 = vadd.f32 0.0, %v178
    %180 = vmatmul.f32.gmra.mxu0 %v110
    %v181 = vpop.f32.mrf.mxu0
    %v182 = vadd.f32 0.0, %v181
    %183 = vdwg.mxu0
    %184 = vmatpush.msra.mxu0 %v142
    %185 = vmatpush.msra.mxu0 %v140
    %186 = vmatpush.msra.mxu0 %v138
    %187 = vmatpush.msra.mxu0 %v136
    %188 = vmatpush.msra.mxu0 %v134
    %189 = vmatpush.msra.mxu0 %v132
    %190 = vmatpush.msra.mxu0 %v130
    %191 = vmatpush.msra.mxu0 %v128
    %192 = vmatpush.msra.mxu0 %v126
    %193 = vmatpush.msra.mxu0 %v124
    %194 = vmatpush.msra.mxu0 %v122
    %195 = vmatpush.msra.mxu0 %v120
    %196 = vmatpush.msra.mxu0 %v118
    %197 = vmatpush.msra.mxu0 %v116
    %198 = vmatpush.msra.mxu0 %v114
    %199 = vmatpush.msra.mxu0 %v112
    %200 = vmatmul.f32.gmra.mxu0 %v103
    %v201 = vpop.f32.mrf.mxu0
    %v202 = vadd.f32 0.0, %v201
    %203 = vmatmul.f32.gmra.mxu0 %v104
    %v204 = vpop.f32.mrf.mxu0
    %v205 = vadd.f32 0.0, %v204
    %206 = vmatmul.f32.gmra.mxu0 %v105
    %v207 = vpop.f32.mrf.mxu0
    %v208 = vadd.f32 0.0, %v207
    %209 = vmatmul.f32.gmra.mxu0 %v106
    %v210 = vpop.f32.mrf.mxu0
    %v211 = vadd.f32 0.0, %v210
    %212 = vmatmul.f32.gmra.mxu0 %v107
    %v213 = vpop.f32.mrf.mxu0
    %v214 = vadd.f32 0.0, %v213
    %215 = vmatmul.f32.gmra.mxu0 %v108
    %v216 = vpop.f32.mrf.mxu0
    %v217 = vadd.f32 0.0, %v216
    %218 = vmatmul.f32.gmra.mxu0 %v109
    %v219 = vpop.f32.mrf.mxu0
    %v220 = vadd.f32 0.0, %v219
    %221 = vmatmul.f32.gmra.mxu0 %v110
    %v222 = vpop.f32.mrf.mxu0
    %v223 = vadd.f32 0.0, %v222
    %224 = vdwg.mxu0
    %v225 = vld [vmem:[%s2] sm:$0x1]
    %v227 = vperm.slane %v225, 0
    %v229 = vadd.f32 %v202, %v227
    %v230 = vadd.f32 %v205, %v227
    %v231 = vadd.f32 %v208, %v227
    %v232 = vadd.f32 %v211, %v227
    %v233 = vadd.f32 %v214, %v227
    %v234 = vadd.f32 %v217, %v227
    %v235 = vadd.f32 %v220, %v227
    %v236 = vadd.f32 %v223, %v227
    %v237 = vxor.u32 %v229, 2147483648
    %v238 = vxor.u32 %v230, 2147483648
    %v239 = vxor.u32 %v231, 2147483648
    %v240 = vxor.u32 %v232, 2147483648
    %v241 = vxor.u32 %v233, 2147483648
    %v242 = vxor.u32 %v234, 2147483648
    %v243 = vxor.u32 %v235, 2147483648
    %v244 = vxor.u32 %v236, 2147483648
    %v245 = vmul.f32 %v237, 1.442695
    %v246 = vpow.pop %v245
    %v247 = vmul.f32 %v238, 1.442695
    %v248 = vpow.pop %v247
    %v249 = vmul.f32 %v239, 1.442695
    %v250 = vpow.pop %v249
    %v251 = vmul.f32 %v240, 1.442695
    %v252 = vpow.pop %v251
    %v253 = vmul.f32 %v241, 1.442695
    %v254 = vpow.pop %v253
    %v255 = vmul.f32 %v242, 1.442695
    %v256 = vpow.pop %v255
    %v257 = vmul.f32 %v243, 1.442695
    %v258 = vpow.pop %v257
    %v259 = vmul.f32 %v244, 1.442695
    %v260 = vpow.pop %v259
    %v261 = vadd.f32 %v246, 1.0
    %v262 = vadd.f32 %v248, 1.0
    %v263 = vadd.f32 %v250, 1.0
    %v264 = vadd.f32 %v252, 1.0
    %v265 = vadd.f32 %v254, 1.0
    %v266 = vadd.f32 %v256, 1.0
    %v267 = vadd.f32 %v258, 1.0
    %v268 = vadd.f32 %v260, 1.0
    %v269 = vrcp.pop %v261
    %v270 = vmul.f32 %v261, %v269
    %v271 = vsub.f32 1.0, %v270
    %v272 = vmul.f32 %v269, %v271
    %v273 = vadd.f32 %v269, %v272
    %vm274 = vweird.f32 %v261
    %vm275 = vweird.f32 %v269
    %vm276 = vmor %vm274, %vm275
    %v277 = vsel %vm276, %v269, %v273
    %v278 = vand.u32 2147483647, %v261
    %vm279 = vcmp.eq.f32.partialorder %v278, 8.507059e+37
    %v280 = vand.u32 %v261, 2147483648
    %v281 = vor.u32 1.1754944e-38, %v280
    %v282 = vsel %vm279, %v281, %v277
    %v283 = vmul.f32 1.0, %v282
    %v284 = vrcp.pop %v262
    %v285 = vmul.f32 %v262, %v284
    %v286 = vsub.f32 1.0, %v285
    %v287 = vmul.f32 %v284, %v286
    %v288 = vadd.f32 %v284, %v287
    %vm289 = vweird.f32 %v262
    %vm290 = vweird.f32 %v284
    %vm291 = vmor %vm289, %vm290
    %v292 = vsel %vm291, %v284, %v288
    %v293 = vand.u32 2147483647, %v262
    %vm294 = vcmp.eq.f32.partialorder %v293, 8.507059e+37
    %v295 = vand.u32 %v262, 2147483648
    %v296 = vor.u32 1.1754944e-38, %v295
    %v297 = vsel %vm294, %v296, %v292
    %v298 = vmul.f32 1.0, %v297
    %v299 = vrcp.pop %v263
    %v300 = vmul.f32 %v263, %v299
    %v301 = vsub.f32 1.0, %v300
    %v302 = vmul.f32 %v299, %v301
    %v303 = vadd.f32 %v299, %v302
    %vm304 = vweird.f32 %v263
    %vm305 = vweird.f32 %v299
    %vm306 = vmor %vm304, %vm305
    %v307 = vsel %vm306, %v299, %v303
    %v308 = vand.u32 2147483647, %v263
    %vm309 = vcmp.eq.f32.partialorder %v308, 8.507059e+37
    %v310 = vand.u32 %v263, 2147483648
    %v311 = vor.u32 1.1754944e-38, %v310
    %v312 = vsel %vm309, %v311, %v307
    %v313 = vmul.f32 1.0, %v312
    %v314 = vrcp.pop %v264
    %v315 = vmul.f32 %v264, %v314
    %v316 = vsub.f32 1.0, %v315
    %v317 = vmul.f32 %v314, %v316
    %v318 = vadd.f32 %v314, %v317
    %vm319 = vweird.f32 %v264
    %vm320 = vweird.f32 %v314
    %vm321 = vmor %vm319, %vm320
    %v322 = vsel %vm321, %v314, %v318
    %v323 = vand.u32 2147483647, %v264
    %vm324 = vcmp.eq.f32.partialorder %v323, 8.507059e+37
    %v325 = vand.u32 %v264, 2147483648
    %v326 = vor.u32 1.1754944e-38, %v325
    %v327 = vsel %vm324, %v326, %v322
    %v328 = vmul.f32 1.0, %v327
    %v329 = vrcp.pop %v265
    %v330 = vmul.f32 %v265, %v329
    %v331 = vsub.f32 1.0, %v330
    %v332 = vmul.f32 %v329, %v331
    %v333 = vadd.f32 %v329, %v332
    %vm334 = vweird.f32 %v265
    %vm335 = vweird.f32 %v329
    %vm336 = vmor %vm334, %vm335
    %v337 = vsel %vm336, %v329, %v333
    %v338 = vand.u32 2147483647, %v265
    %vm339 = vcmp.eq.f32.partialorder %v338, 8.507059e+37
    %v340 = vand.u32 %v265, 2147483648
    %v341 = vor.u32 1.1754944e-38, %v340
    %v342 = vsel %vm339, %v341, %v337
    %v343 = vmul.f32 1.0, %v342
    %v344 = vrcp.pop %v266
    %v345 = vmul.f32 %v266, %v344
    %v346 = vsub.f32 1.0, %v345
    %v347 = vmul.f32 %v344, %v346
    %v348 = vadd.f32 %v344, %v347
    %vm349 = vweird.f32 %v266
    %vm350 = vweird.f32 %v344
    %vm351 = vmor %vm349, %vm350
    %v352 = vsel %vm351, %v344, %v348
    %v353 = vand.u32 2147483647, %v266
    %vm354 = vcmp.eq.f32.partialorder %v353, 8.507059e+37
    %v355 = vand.u32 %v266, 2147483648
    %v356 = vor.u32 1.1754944e-38, %v355
    %v357 = vsel %vm354, %v356, %v352
    %v358 = vmul.f32 1.0, %v357
    %v359 = vrcp.pop %v267
    %v360 = vmul.f32 %v267, %v359
    %v361 = vsub.f32 1.0, %v360
    %v362 = vmul.f32 %v359, %v361
    %v363 = vadd.f32 %v359, %v362
    %vm364 = vweird.f32 %v267
    %vm365 = vweird.f32 %v359
    %vm366 = vmor %vm364, %vm365
    %v367 = vsel %vm366, %v359, %v363
    %v368 = vand.u32 2147483647, %v267
    %vm369 = vcmp.eq.f32.partialorder %v368, 8.507059e+37
    %v370 = vand.u32 %v267, 2147483648
    %v371 = vor.u32 1.1754944e-38, %v370
    %v372 = vsel %vm369, %v371, %v367
    %v373 = vmul.f32 1.0, %v372
    %v374 = vrcp.pop %v268
    %v375 = vmul.f32 %v268, %v374
    %v376 = vsub.f32 1.0, %v375
    %v377 = vmul.f32 %v374, %v376
    %v378 = vadd.f32 %v374, %v377
    %vm379 = vweird.f32 %v268
    %vm380 = vweird.f32 %v374
    %vm381 = vmor %vm379, %vm380
    %v382 = vsel %vm381, %v374, %v378
    %v383 = vand.u32 2147483647, %v268
    %vm384 = vcmp.eq.f32.partialorder %v383, 8.507059e+37
    %v385 = vand.u32 %v268, 2147483648
    %v386 = vor.u32 1.1754944e-38, %v385
    %v387 = vsel %vm384, %v386, %v382
    %v388 = vmul.f32 1.0, %v387
    %v389 = vmul.f32 %v161, %v283
    %v390 = vmul.f32 %v164, %v298
    %v391 = vmul.f32 %v167, %v313
    %v392 = vmul.f32 %v170, %v328
    %v393 = vmul.f32 %v173, %v343
    %v394 = vmul.f32 %v176, %v358
    %v395 = vmul.f32 %v179, %v373
    %v396 = vmul.f32 %v182, %v388
    %v397 = vrot.slane %v389, 4
    %v398 = vadd.f32 %v389, %v397
    %v399 = vrot.slane %v398, 2
    %v400 = vadd.f32 %v398, %v399
    %v401 = vrot.slane %v400, 1
    %v402 = vadd.f32 %v400, %v401
    %v403 = vrot.slane %v390, 4
    %v404 = vadd.f32 %v390, %v403
    %v405 = vrot.slane %v404, 2
    %v406 = vadd.f32 %v404, %v405
    %v407 = vrot.slane %v406, 1
    %v408 = vadd.f32 %v406, %v407
    %v409 = vrot.slane %v391, 4
    %v410 = vadd.f32 %v391, %v409
    %v411 = vrot.slane %v410, 2
    %v412 = vadd.f32 %v410, %v411
    %v413 = vrot.slane %v412, 1
    %v414 = vadd.f32 %v412, %v413
    %v415 = vrot.slane %v392, 4
    %v416 = vadd.f32 %v392, %v415
    %v417 = vrot.slane %v416, 2
    %v418 = vadd.f32 %v416, %v417
    %v419 = vrot.slane %v418, 1
    %v420 = vadd.f32 %v418, %v419
    %v421 = vrot.slane %v393, 4
    %v422 = vadd.f32 %v393, %v421
    %v423 = vrot.slane %v422, 2
    %v424 = vadd.f32 %v422, %v423
    %v425 = vrot.slane %v424, 1
    %v426 = vadd.f32 %v424, %v425
    %v427 = vrot.slane %v394, 4
    %v428 = vadd.f32 %v394, %v427
    %v429 = vrot.slane %v428, 2
    %v430 = vadd.f32 %v428, %v429
    %v431 = vrot.slane %v430, 1
    %v432 = vadd.f32 %v430, %v431
    %v433 = vrot.slane %v395, 4
    %v434 = vadd.f32 %v395, %v433
    %v435 = vrot.slane %v434, 2
    %v436 = vadd.f32 %v434, %v435
    %v437 = vrot.slane %v436, 1
    %v438 = vadd.f32 %v436, %v437
    %v439 = vrot.slane %v396, 4
    %v440 = vadd.f32 %v396, %v439
    %v441 = vrot.slane %v440, 2
    %v442 = vadd.f32 %v440, %v441
    %v443 = vrot.slane %v442, 1
    %v444 = vadd.f32 %v442, %v443
    %v445 = vld [vmem:[#allocation8] sm:$0xff]
    %v446 = vld [vmem:[#allocation8 + $0x8] sm:$0xff]
    %v447 = vld [vmem:[#allocation8 + $0x10] sm:$0xff]
    %v448 = vld [vmem:[#allocation8 + $0x18] sm:$0xff]
    %v449 = vld [vmem:[#allocation8 + $0x20] sm:$0xff]
    %v450 = vld [vmem:[#allocation8 + $0x28] sm:$0xff]
    %v451 = vld [vmem:[#allocation8 + $0x30] sm:$0xff]
    %v452 = vld [vmem:[#allocation8 + $0x38] sm:$0xff]
    %v453 = vld [vmem:[#allocation8 + $0x40] sm:$0xff]
    %v454 = vld [vmem:[#allocation8 + $0x48] sm:$0xff]
    %v455 = vld [vmem:[#allocation8 + $0x50] sm:$0xff]
    %v456 = vld [vmem:[#allocation8 + $0x58] sm:$0xff]
    %v457 = vld [vmem:[#allocation8 + $0x60] sm:$0xff]
    %v458 = vld [vmem:[#allocation8 + $0x68] sm:$0xff]
    %v459 = vld [vmem:[#allocation8 + $0x70] sm:$0xff]
    %v460 = vld [vmem:[#allocation8 + $0x78] sm:$0xff]
    %v461 = vld [vmem:[#allocation7] sm:$0xff]
    %v462 = vld [vmem:[#allocation10] sm:$0xff]
    %v463 = vld [vmem:[#allocation10 + $0x8] sm:$0xff]
    %v464 = vld [vmem:[#allocation10 + $0x10] sm:$0xff]
    %v465 = vld [vmem:[#allocation10 + $0x18] sm:$0xff]
    %v466 = vld [vmem:[#allocation10 + $0x20] sm:$0xff]
    %v467 = vld [vmem:[#allocation10 + $0x28] sm:$0xff]
    %v468 = vld [vmem:[#allocation10 + $0x30] sm:$0xff]
    %v469 = vld [vmem:[#allocation10 + $0x38] sm:$0xff]
    %v470 = vld [vmem:[#allocation10 + $0x40] sm:$0xff]
    %v471 = vld [vmem:[#allocation10 + $0x48] sm:$0xff]
    %v472 = vld [vmem:[#allocation10 + $0x50] sm:$0xff]
    %v473 = vld [vmem:[#allocation10 + $0x58] sm:$0xff]
    %v474 = vld [vmem:[#allocation10 + $0x60] sm:$0xff]
    %v475 = vld [vmem:[#allocation10 + $0x68] sm:$0xff]
    %v476 = vld [vmem:[#allocation10 + $0x70] sm:$0xff]
    %v477 = vld [vmem:[#allocation10 + $0x78] sm:$0xff]
    %478 = vmatpush.msra.mxu0 %v477
    %479 = vmatpush.msra.mxu0 %v476
    %480 = vmatpush.msra.mxu0 %v475
    %481 = vmatpush.msra.mxu0 %v474
    %482 = vmatpush.msra.mxu0 %v473
    %483 = vmatpush.msra.mxu0 %v472
    %484 = vmatpush.msra.mxu0 %v471
    %485 = vmatpush.msra.mxu0 %v470
    %486 = vmatpush.msra.mxu0 %v469
    %487 = vmatpush.msra.mxu0 %v468
    %488 = vmatpush.msra.mxu0 %v467
    %489 = vmatpush.msra.mxu0 %v466
    %490 = vmatpush.msra.mxu0 %v465
    %491 = vmatpush.msra.mxu0 %v464
    %492 = vmatpush.msra.mxu0 %v463
    %493 = vmatpush.msra.mxu0 %v462
    %494 = vmatmul.f32.gmra.mxu0 %v461
    %v495 = vpop.f32.mrf.mxu0
    %v496 = vadd.f32 0.0, %v495
    %497 = vdwg.mxu0
    %vm506 = vcmask 1041409
    %v507 = vsel %vm506, %v408, %v402
    %vm508 = vcmask 1042434
    %v509 = vsel %vm508, %v414, %v507
    %vm510 = vcmask 1043459
    %v511 = vsel %vm510, %v420, %v509
    %vm512 = vcmask 1044484
    %v513 = vsel %vm512, %v426, %v511
    %vm514 = vcmask 1045509
    %v515 = vsel %vm514, %v432, %v513
    %vm516 = vcmask 1046534
    %v517 = vsel %vm516, %v438, %v515
    %vm518 = vcmask 1047559
    %v519 = vsel %vm518, %v444, %v517
    %521 = vmatpush.msra.mxu0 %v460
    %522 = vmatpush.msra.mxu0 %v459
    %523 = vmatpush.msra.mxu0 %v458
    %524 = vmatpush.msra.mxu0 %v457
    %525 = vmatpush.msra.mxu0 %v456
    %526 = vmatpush.msra.mxu0 %v455
    %527 = vmatpush.msra.mxu0 %v454
    %528 = vmatpush.msra.mxu0 %v453
    %529 = vmatpush.msra.mxu0 %v452
    %530 = vmatpush.msra.mxu0 %v451
    %531 = vmatpush.msra.mxu0 %v450
    %532 = vmatpush.msra.mxu0 %v449
    %533 = vmatpush.msra.mxu0 %v448
    %534 = vmatpush.msra.mxu0 %v447
    %535 = vmatpush.msra.mxu0 %v446
    %536 = vmatpush.msra.mxu0 %v445
    %537 = vmatmul.f32.gmra.mxu0 %v519
    %v538 = vpop.f32.mrf.mxu0
    %v539 = vadd.f32 %v496, %v538
    %540 = vdwg.mxu0
    %v541 = vld [vmem:[%s6] sm:$0x1]
    %v543 = vperm.slane %v541, 0
    %v545 = vadd.f32 %v539, %v543
    %546 = vst [vmem:[#allocation11] sm:$0xff] %v545
    // Predicated region
    $region50: #{tpu_custom_call.1} parent=1 // pred_check
      _
    $region51: #{tpu_custom_call.1} parent=1 // pred_check_branch
      %548 = sbr.rel (0) target = $region53
    $region52: #{tpu_custom_call.1} parent=1 // pred_region
      %550 = vsyncadd [#allocation4], 0
      %s552 = sshll.u32 [#allocation11], 4
      %s553 = int_to_ptr.vmem [resolvable:$true] %s552
      %s554 = sshll.u32 %s7, 4
      %s555 = int_to_ptr.hbm [resolvable:$true] %s554
      %557 = dma.vmem_to_hbm [thread:$0]  %s553, 128, %s555, [#allocation4]
    $region53: #{tpu_custom_call.1} parent=1 // pred_fallthru
      _
    // Predicated region
    $region54: #{tpu_custom_call.1} parent=1 // pred_check
      _
    $region55: #{tpu_custom_call.1} parent=1 // pred_check_branch
      %559 = sbr.rel (0) target = $region57
    $region56: #{tpu_custom_call.1} parent=1 // pred_region
      %561 = dma.done [#allocation4], 128
    $region57: #{tpu_custom_call.1} parent=1 // pred_fallthru
      _
    %562 = vsyncpa [#allocation3], 1
    %563 = vsyncpa [#allocation6], 1
    %564 = vsyncpa [#allocation9], 1
    %565 = vsyncpa [#allocation4], 1

</llo_original>
